<compile_context>
chip_gen: v7x
topology: tpu7x:2x2x1
jax: 0.10.0
libtpu: 0.0.40
codegen_flags: <defaults>
</compile_context>

<pallas_src>
import functools

import jax
import jax.numpy as jnp
from jax.experimental import pallas as pl
from jax.experimental.pallas import tpu as pltpu


def _ffn_kernel(x_ref, w1_ref, b1_ref, w2_ref, b2_ref, o_ref, acc_ref, *,
                activation):
    # x_ref : (TN, d_model)      token-row tile, original dtype
    # w1_ref: (d_model, TK)      W1 column tile, compute dtype (double-buffered)
    # b1_ref: (1, TK)            f32
    # w2_ref: (TK, d_model)      W2 row tile, compute dtype (double-buffered)
    # b2_ref: (1, d_model)       f32 (grid-invariant, single-buffered)
    # o_ref : (TN, d_model)      output tile, original dtype
    # acc_ref: (TN, d_model) f32 accumulator scratch (persists across k)
    k = pl.program_id(1)

    @pl.when(k == 0)
    def _():
        acc_ref[...] = jnp.zeros_like(acc_ref)

    # Cast the activation tile on the VPU right before the MXU (avoids a
    # wrapper-side HBM pass); f32 accumulation regardless of operand dtype.
    x = x_ref[...].astype(w1_ref.dtype)
    h = jnp.dot(x, w1_ref[...], preferred_element_type=jnp.float32)
    h = activation(h + b1_ref[...])                     # bias + act in f32 (VPU)
    acc_ref[...] += jnp.dot(h.astype(w2_ref.dtype), w2_ref[...],
                            preferred_element_type=jnp.float32)

    @pl.when(k == pl.num_programs(1) - 1)
    def _():
        # dropout: identity (eval mode)
        o_ref[...] = (acc_ref[...] + b2_ref[...]).astype(o_ref.dtype)


def _vmem_budget_bytes():
    """Generation-aware usable-VMEM budget (capacity minus headroom)."""
    try:
        cap = int(pltpu.get_tpu_info().vmem_capacity_bytes)
    except Exception:                       # pragma: no cover - defensive
        cap = 64 << 20                      # conservative (v7x-sized) fallback
    headroom = (8 << 20) if cap <= (64 << 20) else (16 << 20)
    return cap - headroom                   # ~56 MiB on v7x, ~112 MiB on v5e/v6e


def _pick_tk_ff(d_ff, target=512):
    """Largest 128-multiple divisor of d_ff that is <= target (else d_ff)."""
    if d_ff <= target:
        return d_ff
    for cand in range(target, 127, -128):
        if d_ff % cand == 0:
            return cand
    return d_ff


def prepare_ffn_params(w1, b1, w2, b2, compute_dtype=jnp.bfloat16):
    """One-time (model-setup) conversion of parameters to the compute dtype.

    Returns (w1c, b1_2d, w2c, b2_2d).  Weights are cast to `compute_dtype`
    (the dtype fed to the MXU); biases are kept in f32 and reshaped to 2-D
    so they live lane-major in VMEM.  Do this ONCE, not per forward call.
    """
    d_model, d_ff = w1.shape
    return (w1.astype(compute_dtype),
            b1.reshape(1, d_ff).astype(jnp.float32),
            w2.astype(compute_dtype),
            b2.reshape(1, d_model).astype(jnp.float32))


def positionwise_ffn(x, w1c, b1_2d, w2c, b2_2d, *, tile_n=256, tk_ff=None,
                     activation=None):
    """FFN forward: x (..., d_model) -> (..., d_model).

    w1c/w2c must already be in the desired MXU compute dtype (bf16 is the fast
    path; see prepare_ffn_params).  Accumulation is always f32.
    tile_n: token rows per grid step (128/256 recommended, 512+ on v5e/v6e).
    tk_ff : hidden-dim tile (128-multiple divisor of d_ff).
    """
    if activation is None:
        activation = lambda v: jnp.maximum(v, 0.0)       # ReLU
    orig_shape = x.shape
    out_dtype = x.dtype
    d_model = orig_shape[-1]
    d_ff = w1c.shape[1]
    compute_dtype = w1c.dtype

    if tk_ff is None:
        tk_ff = _pick_tk_ff(d_ff)
    assert d_ff % tk_ff == 0, "tk_ff must divide d_ff"
    assert tk_ff == d_ff or tk_ff % 128 == 0, "tk_ff must be a multiple of 128"
    assert tile_n % 8 == 0, "tile_n must be a multiple of 8 (sublane)"
    if (jnp.dtype(compute_dtype).itemsize == 2
            or jnp.dtype(x.dtype).itemsize == 2):
        assert tile_n % 16 == 0, "tile_n must be a multiple of 16 for 16-bit dtypes"

    x2 = x.reshape(-1, d_model)                          # no cast, no pad
    n = x2.shape[0]
    grid_n = pl.cdiv(n, tile_n)                          # ragged last tile is
    grid_k = d_ff // tk_ff                               # masked by Pallas

    x_item = jnp.dtype(x.dtype).itemsize
    w_item = jnp.dtype(compute_dtype).itemsize
    o_item = jnp.dtype(out_dtype).itemsize

    # VMEM footprint: double-buffered x/out/W1/W2/b1 tiles + single-buffered
    # b2 + f32 accumulator scratch + f32 hidden intermediate; 1.5x margin,
    # capped at the generation-aware budget (never 100% of physical VMEM).
    vmem_est = (2 * tile_n * d_model * x_item            # x tiles
                + 2 * tile_n * d_model * o_item          # out tiles
                + 2 * d_model * tk_ff * w_item           # W1 tiles
                + 2 * tk_ff * d_model * w_item           # W2 tiles
                + 2 * tk_ff * 4 + d_model * 4            # biases
                + tile_n * d_model * 4                   # acc scratch
                + tile_n * tk_ff * 4)                    # f32 hidden tile
    vmem_limit = int(min(max(vmem_est * 3 // 2 + (2 << 20), 32 << 20),
                         _vmem_budget_bytes()))

    # Advisory cost estimate for XLA's scheduler.
    flops = 4 * n * d_model * d_ff                       # 2 matmuls, 2*M*K*N each
    bytes_accessed = (x2.size * x_item
                      + (w1c.size + w2c.size) * w_item
                      + (d_ff + d_model) * 4
                      + n * d_model * o_item)

    out = pl.pallas_call(
        functools.partial(_ffn_kernel, activation=activation),
        out_shape=jax.ShapeDtypeStruct((n, d_model), out_dtype),
        grid_spec=pltpu.PrefetchScalarGridSpec(
            num_scalar_prefetch=0,
            grid=(grid_n, grid_k),                       # reduction axis last
            in_specs=[
                # x tile: invariant along k (Pallas skips the re-copy).
                pl.BlockSpec((tile_n, d_model), lambda i, k: (i, 0)),
                # Weight tiles vary along k -> default double buffering so the
                # k+1 weight DMA overlaps the k matmul.
                pl.BlockSpec((d_model, tk_ff), lambda i, k: (0, k)),
                pl.BlockSpec((1, tk_ff), lambda i, k: (0, k)),
                pl.BlockSpec((tk_ff, d_model), lambda i, k: (k, 0)),
                # b2 is grid-invariant: single-buffered (copied once).
                pl.BlockSpec((1, d_model), lambda i, k: (0, 0),
                             pipeline_mode=pl.Buffered(1)),
            ],
            out_specs=pl.BlockSpec((tile_n, d_model), lambda i, k: (i, 0)),
            scratch_shapes=[pltpu.VMEM((tile_n, d_model), jnp.float32)],
        ),
        compiler_params=pltpu.CompilerParams(
            dimension_semantics=("parallel", "arbitrary"),
            vmem_limit_bytes=vmem_limit),
        cost_estimate=pl.CostEstimate(flops=flops, transcendentals=0,
                                      bytes_accessed=bytes_accessed),
    )(x2, w1c, b1_2d, w2c, b2_2d)

    return out.reshape(orig_shape)


def make_params(key, d_model, d_ff, dtype=jnp.float32):
    """Deterministic parameter init (uniform, PyTorch-Linear-like bounds)."""
    k1, k2, k3, k4 = jax.random.split(key, 4)
    bound1 = 1.0 / (d_model ** 0.5)
    bound2 = 1.0 / (d_ff ** 0.5)
    # stored as (in, out) — transposed vs. PyTorch's (out, in)
    w1 = jax.random.uniform(k1, (d_model, d_ff), dtype, -bound1, bound1)
    b1 = jax.random.uniform(k2, (d_ff,), dtype, -bound1, bound1)
    w2 = jax.random.uniform(k3, (d_ff, d_model), dtype, -bound2, bound2)
    b2 = jax.random.uniform(k4, (d_model,), dtype, -bound2, bound2)
    return w1, b1, w2, b2


if __name__ == "__main__":
    key = jax.random.PRNGKey(0)
    # Small but lane-aligned shapes (d_model, d_ff multiples of 128);
    # batch*seq = 200 is deliberately NOT a tile multiple to exercise the
    # ragged (masked) last token tile.
    batch, seq, d_model, d_ff = 2, 100, 128, 256

    kx, kp = jax.random.split(key)
    x = jax.random.normal(kx, (batch, seq, d_model), jnp.float32)
    w1, b1, w2, b2 = make_params(kp, d_model, d_ff)

    # Reference in plain JAX (dropout = identity in eval mode).
    ref = jnp.maximum(x @ w1 + b1, 0.0) @ w2 + b2

    # f32 MXU path (slow path, tight tolerance).  tk_ff=128 exercises the
    # d_ff reduction axis (grid_k=2); tile_n=128 with n=200 exercises the
    # ragged final token tile (grid_n=2).
    p_f32 = prepare_ffn_params(w1, b1, w2, b2, compute_dtype=jnp.float32)
    y = positionwise_ffn(x, *p_f32, tile_n=128, tk_ff=128)
    y = jax.block_until_ready(y)
    assert y.shape == x.shape and y.dtype == x.dtype
    assert jnp.allclose(y, ref, atol=1e-3, rtol=1e-3), "f32 path mismatch"

    # bf16 MXU path (default / fast path): weights pre-cast once, x cast
    # in-kernel, f32 accumulation.
    p_bf16 = prepare_ffn_params(w1, b1, w2, b2, compute_dtype=jnp.bfloat16)
    y_bf = positionwise_ffn(x, *p_bf16, tile_n=256)
    y_bf = jax.block_until_ready(y_bf)
    assert y_bf.shape == x.shape and y_bf.dtype == x.dtype
    assert jnp.allclose(y_bf, ref, atol=5e-2, rtol=5e-2), "bf16 path mismatch"

    print("KERNEL_OK")
</pallas_src>

<mosaic_0001>
module attributes {stable_mosaic.version = 11 : i64} {
  func.func @_ffn_kernel(%arg0: i32, %arg1: i32, %arg2: memref<128x128xf32, #tpu.memory_space<vmem>>, %arg3: memref<128x128xf32, #tpu.memory_space<vmem>>, %arg4: memref<1x128xf32, #tpu.memory_space<vmem>>, %arg5: memref<128x128xf32, #tpu.memory_space<vmem>>, %arg6: memref<1x128xf32, #tpu.memory_space<vmem>>, %arg7: memref<128x128xf32, #tpu.memory_space<vmem>>, %arg8: memref<128x128xf32, #tpu.memory_space<vmem>>) attributes {dimension_semantics = [#tpu.dimension_semantics<parallel>, #tpu.dimension_semantics<arbitrary>], iteration_bounds = array<i64: 2, 2>, scalar_prefetch = 0 : i64, scratch_operands = 1 : i64, tpu.core_type = #tpu.core_type<tc>, window_params = [{transform_indices = @transform_0, window_bounds = array<i64: 128, 128>}, {transform_indices = @transform_1, window_bounds = array<i64: 128, 128>}, {transform_indices = @transform_2, window_bounds = array<i64: 1, 128>}, {transform_indices = @transform_3, window_bounds = array<i64: 128, 128>}, {pipeline_mode = #tpu.pipeline_mode<synchronous>, transform_indices = @transform_4, window_bounds = array<i64: 1, 128>}, {transform_indices = @transform_5, window_bounds = array<i64: 128, 128>}]} {
    %c0_i32 = arith.constant 0 : i32
    %0 = arith.cmpi eq, %arg1, %c0_i32 : i32
    %1 = arith.extui %0 : i1 to i32
    %c0_i32_0 = arith.constant 0 : i32
    %2 = arith.cmpi ne, %1, %c0_i32_0 : i32
    scf.if %2 {
      %cst_15 = arith.constant 0.000000e+00 : f32
      %19 = vector.broadcast %cst_15 : f32 to vector<128x128xf32>
      %c0_16 = arith.constant 0 : index
      %c0_17 = arith.constant 0 : index
      %20 = vector.load %arg8[%c0_16, %c0_17] : memref<128x128xf32, #tpu.memory_space<vmem>>, vector<128x128xf32>
      tpu.vector_store %arg8[%c0_16, %c0_17], %19 {strides = array<i32>} : memref<128x128xf32, #tpu.memory_space<vmem>>, vector<128x128xf32>,
    } else {
    }
    %c0 = arith.constant 0 : index
    %c0_1 = arith.constant 0 : index
    %3 = vector.load %arg2[%c0, %c0_1] : memref<128x128xf32, #tpu.memory_space<vmem>>, vector<128x128xf32>
    %c0_2 = arith.constant 0 : index
    %c0_3 = arith.constant 0 : index
    %4 = vector.load %arg3[%c0_2, %c0_3] : memref<128x128xf32, #tpu.memory_space<vmem>>, vector<128x128xf32>
    %cst = arith.constant dense<0.000000e+00> : vector<128x128xf32>
    %5 = tpu.matmul %3, %4, %cst {dimension_numbers = #tpu.dot_dimension_numbers<[1], [0], [0], [1], [0, 0, 1, 1], [], []>} : vector<128x128xf32>, vector<128x128xf32>, vector<128x128xf32> -> vector<128x128xf32>
    %c0_4 = arith.constant 0 : index
    %c0_5 = arith.constant 0 : index
    %6 = vector.load %arg4[%c0_4, %c0_5] : memref<1x128xf32, #tpu.memory_space<vmem>>, vector<1x128xf32>
    %7 = vector.broadcast %6 : vector<1x128xf32> to vector<128x128xf32>
    %8 = arith.addf %5, %7 : vector<128x128xf32>
    %cst_6 = arith.constant 0.000000e+00 : f32
    %9 = vector.broadcast %cst_6 : f32 to vector<128x128xf32>
    %10 = arith.maximumf %8, %9 : vector<128x128xf32>
    %c0_7 = arith.constant 0 : index
    %c0_8 = arith.constant 0 : index
    %11 = vector.load %arg8[%c0_7, %c0_8] : memref<128x128xf32, #tpu.memory_space<vmem>>, vector<128x128xf32>
    %c0_9 = arith.constant 0 : index
    %c0_10 = arith.constant 0 : index
    %12 = vector.load %arg5[%c0_9, %c0_10] : memref<128x128xf32, #tpu.memory_space<vmem>>, vector<128x128xf32>
    %cst_11 = arith.constant dense<0.000000e+00> : vector<128x128xf32>
    %13 = tpu.matmul %10, %12, %cst_11 {dimension_numbers = #tpu.dot_dimension_numbers<[1], [0], [0], [1], [0, 0, 1, 1], [], []>} : vector<128x128xf32>, vector<128x128xf32>, vector<128x128xf32> -> vector<128x128xf32>
    %14 = arith.addf %11, %13 : vector<128x128xf32>
    %c0_12 = arith.constant 0 : index
    %c0_13 = arith.constant 0 : index
    %15 = vector.load %arg8[%c0_12, %c0_13] : memref<128x128xf32, #tpu.memory_space<vmem>>, vector<128x128xf32>
    tpu.vector_store %arg8[%c0_12, %c0_13], %14 {strides = array<i32>} : memref<128x128xf32, #tpu.memory_space<vmem>>, vector<128x128xf32>,
    %c1_i32 = arith.constant 1 : i32
    %16 = arith.cmpi eq, %arg1, %c1_i32 : i32
    %17 = arith.extui %16 : i1 to i32
    %c0_i32_14 = arith.constant 0 : i32
    %18 = arith.cmpi ne, %17, %c0_i32_14 : i32
    scf.if %18 {
      %c0_15 = arith.constant 0 : index
      %c0_16 = arith.constant 0 : index
      %19 = vector.load %arg8[%c0_15, %c0_16] : memref<128x128xf32, #tpu.memory_space<vmem>>, vector<128x128xf32>
      %c0_17 = arith.constant 0 : index
      %c0_18 = arith.constant 0 : index
      %20 = vector.load %arg6[%c0_17, %c0_18] : memref<1x128xf32, #tpu.memory_space<vmem>>, vector<1x128xf32>
      %21 = vector.broadcast %20 : vector<1x128xf32> to vector<128x128xf32>
      %22 = arith.addf %19, %21 : vector<128x128xf32>
      %c0_19 = arith.constant 0 : index
      %c0_20 = arith.constant 0 : index
      %23 = vector.load %arg7[%c0_19, %c0_20] : memref<128x128xf32, #tpu.memory_space<vmem>>, vector<128x128xf32>
      tpu.vector_store %arg7[%c0_19, %c0_20], %22 {strides = array<i32>} : memref<128x128xf32, #tpu.memory_space<vmem>>, vector<128x128xf32>,
    } else {
    }
    return
  }
  func.func @transform_0(%arg0: i32, %arg1: i32) -> (i32, i32) {
    %c0_i32 = arith.constant 0 : i32
    %c0_i32_0 = arith.constant 0 : i32
    return %arg0, %c0_i32 : i32, i32
  }
  func.func @transform_1(%arg0: i32, %arg1: i32) -> (i32, i32) {
    %c0_i32 = arith.constant 0 : i32
    %c0_i32_0 = arith.constant 0 : i32
    return %c0_i32, %arg1 : i32, i32
  }
  func.func @transform_2(%arg0: i32, %arg1: i32) -> (i32, i32) {
    %c0_i32 = arith.constant 0 : i32
    %c0_i32_0 = arith.constant 0 : i32
    return %c0_i32, %arg1 : i32, i32
  }
  func.func @transform_3(%arg0: i32, %arg1: i32) -> (i32, i32) {
    %c0_i32 = arith.constant 0 : i32
    %c0_i32_0 = arith.constant 0 : i32
    return %arg1, %c0_i32 : i32, i32
  }
  func.func @transform_4(%arg0: i32, %arg1: i32) -> (i32, i32) {
    %c0_i32 = arith.constant 0 : i32
    %c0_i32_0 = arith.constant 0 : i32
    %c0_i32_1 = arith.constant 0 : i32
    return %c0_i32, %c0_i32_0 : i32, i32
  }
  func.func @transform_5(%arg0: i32, %arg1: i32) -> (i32, i32) {
    %c0_i32 = arith.constant 0 : i32
    %c0_i32_0 = arith.constant 0 : i32
    return %arg0, %c0_i32 : i32, i32
  }
}

</mosaic_0001>

<llo_original>
// kernel: tpu_custom_call.1
$region0: #{tpu_custom_call.1}
  #allocation0 [shape = 'u32[]', space=smem, size = 0x4, offset = 0x4, fixed_abs, tag = 'smem constant byte address 0x4 - core index']
  #allocation1 [shape = 'u32[144,128]{1,0:T(1,128)}', space=vmem, size = 0x12000, scoped, tag = 'internal scratch']
  #allocation2 [shape = 'f32[128,128]{1,0:T(8,128)}', space=vmem, size = 0x10000, scoped, tag = 'scratch operand']
  %s0 = inlined_call_operand.hbm [shape: f32[200,128], index: 0, kind: input, shape index: {}]
  %s1 = inlined_call_operand.hbm [shape: f32[128,256], index: 1, kind: input, shape index: {}]
  %s2 = inlined_call_operand.vmem [shape: f32[1,256], index: 2, kind: input, shape index: {}]
  %s3 = inlined_call_operand.hbm [shape: f32[256,128], index: 3, kind: input, shape index: {}]
  %s4 = inlined_call_operand.vmem [shape: f32[1,128], index: 4, kind: input, shape index: {}]
  %s5 = inlined_call_operand.hbm [shape: f32[200,128], index: 5, kind: output, shape index: {}]
  %s6 = sld [smem:[#allocation0]]
  $region73: #{tpu_custom_call.1} parent=0
    _
  %s8 = ssub.s32 1, %s6
  %s9 = scalar_select 0, %s8, %s6
  $region1: #{tpu_custom_call.1} parent=0
    #allocation3 [shape = 'u8[131072]{0}', space=vmem, size = 0x20000, scoped, tag = 'input window, operand 0']
    #allocation4 [shape = 's32[2]{0}', space=sflag, size = 0x8, scoped, tag = 'scoped memory for tpu_custom_call.1']
    #allocation5 [shape = 's32[2]{0}', space=sflag, size = 0x8, scoped, tag = 'scoped memory for tpu_custom_call.1']
    #allocation6 [shape = 'u8[131072]{0}', space=vmem, size = 0x20000, scoped, tag = 'input window, operand 1']
    #allocation7 [shape = 's32[2]{0}', space=sflag, size = 0x8, scoped, tag = 'scoped memory for tpu_custom_call.1']
    #allocation8 [shape = 'u8[131072]{0}', space=vmem, size = 0x20000, scoped, tag = 'input window, operand 3']
    #allocation9 [shape = 'u8[131072]{0}', space=vmem, size = 0x20000, scoped, tag = 'output window, operand 0']
    %10 = vsyncpa [#allocation4], 0
    %s11 = scalar_lea.sflag [#allocation4], 1
    %12 = vsyncpa %s11, 0
    %13 = vsyncpa [#allocation7], 0
    %s14 = scalar_lea.sflag [#allocation7], 1
    %15 = vsyncpa %s14, 0
    %16 = vsyncpa [#allocation5], 0
    %s17 = scalar_lea.sflag [#allocation5], 1
    %18 = vsyncpa %s17, 0
    loop: start=0, step=1, limit=6
    $region2: #{tpu_custom_call.1} parent=1 // loop_pre_header
      _
    $region3: #{tpu_custom_call.1} parent=1 // loop_header
      %s20 = sphi 0, %s24
      %p21 = scmp.ge.s32.totalorder %s20, 6
      %s27 = sphi 0, %s39
      %s28 = sphi 0, %s35
      %s29 = sphi 0, %s27
      %s30 = sphi 0, %s28
      %s31 = sphi 0, %s29
      %s32 = sphi 0, %s30
      %s42 = sphi 0, %s44
      %s45 = sphi 0, %s42
      %s46 = sphi 0, %s45
      %s62 = sphi 0, %s46
      %s68 = sphi 0, %s70
      %s71 = sphi 0, %s68
      %s72 = sphi 0, %s71
      %s88 = sphi 0, %s72
      %s94 = sphi 0, %s96
      %s97 = sphi 0, %s94
      %s98 = sphi 0, %s97
      %s114 = sphi 0, %s98
      %s120 = sphi 0, %s122
      %s123 = sphi 0, %s120
      %s124 = sphi 0, %s123
      %s140 = sphi 0, %s124
      %s144 = sphi 0, %s144
      %s146 = sphi 0, %s144
      %s147 = sphi 0, %s146
      %s161 = sphi 0, %s147
      %s167 = sphi 0, %s169
      %s170 = sphi 0, %s167
      %s171 = sphi 0, %s170
      %s187 = sphi 0, %s171
    $region4: #{tpu_custom_call.1} parent=1 // loop_header_branch
      %23 = sbr.rel (%p21) target = $region8
    $region5: #{tpu_custom_call.1} parent=1 // loop_body
      %s25 = ssub.s32 %s20, 1
      %s26 = ssub.s32 %s20, 2
      %s33 = sadd.s32 1, %s28
      %p34 = scmp.ge.s32.totalorder %s33, 2
      %s35 = scalar_select %p34, 0, %s33
      %s36 = sadd.s32 1, %s27
      %s37 = scalar_select %p34, %s36, %s27
      %p38 = scmp.ge.s32.totalorder %s37, 2
      %s39 = scalar_select %p38, 0, %s37
      %s40 = ssub.s32 %s27, %s39
      %p41 = scmp.eq.s32.totalorder %s40, 0
      %s43 = sadd.s32 %s42, 1
      %s44 = scalar_select %p41, %s42, %s43
      %p47 = pneg %p41
      %p48 = scmp.eq.s32.totalorder %s20, 3
      %p49 = por %p47, %p48
      %p50 = scmp.ne.s32.totalorder %s42, %s45
      %p51 = scmp.eq.s32.totalorder %s20, 0
      %p52 = por %p50, %p51
      %p53 = scmp.ne.s32.totalorder %s42, %s45
      %p54 = scmp.eq.s32.totalorder %s25, 3
      %p55 = por %p53, %p54
      %p56 = scmp.ne.s32.totalorder %s45, %s46
      %p57 = scmp.eq.s32.totalorder %s25, 0
      %p58 = por %p56, %p57
      %p59 = scmp.ne.s32.totalorder %s45, %s46
      %p60 = scmp.eq.s32.totalorder %s26, 3
      %p61 = por %p59, %p60
      %p63 = scmp.ne.s32.totalorder %s46, %s62
      %p64 = scmp.eq.s32.totalorder %s26, 0
      %p65 = por %p63, %p64
      %s66 = ssub.s32 %s28, %s35
      %p67 = scmp.eq.s32.totalorder %s66, 0
      %s69 = sadd.s32 %s68, 1
      %s70 = scalar_select %p67, %s68, %s69
      %p73 = pneg %p67
      %p74 = scmp.eq.s32.totalorder %s20, 3
      %p75 = por %p73, %p74
      %p76 = scmp.ne.s32.totalorder %s68, %s71
      %p77 = scmp.eq.s32.totalorder %s20, 0
      %p78 = por %p76, %p77
      %p79 = scmp.ne.s32.totalorder %s68, %s71
      %p80 = scmp.eq.s32.totalorder %s25, 3
      %p81 = por %p79, %p80
      %p82 = scmp.ne.s32.totalorder %s71, %s72
      %p83 = scmp.eq.s32.totalorder %s25, 0
      %p84 = por %p82, %p83
      %p85 = scmp.ne.s32.totalorder %s71, %s72
      %p86 = scmp.eq.s32.totalorder %s26, 3
      %p87 = por %p85, %p86
      %p89 = scmp.ne.s32.totalorder %s72, %s88
      %p90 = scmp.eq.s32.totalorder %s26, 0
      %p91 = por %p89, %p90
      %s92 = ssub.s32 %s28, %s35
      %p93 = scmp.eq.s32.totalorder %s92, 0
      %s95 = sadd.s32 %s94, 1
      %s96 = scalar_select %p93, %s94, %s95
      %p99 = pneg %p93
      %p100 = scmp.eq.s32.totalorder %s20, 3
      %p101 = por %p99, %p100
      %p102 = scmp.ne.s32.totalorder %s94, %s97
      %p103 = scmp.eq.s32.totalorder %s20, 0
      %p104 = por %p102, %p103
      %p105 = scmp.ne.s32.totalorder %s94, %s97
      %p106 = scmp.eq.s32.totalorder %s25, 3
      %p107 = por %p105, %p106
      %p108 = scmp.ne.s32.totalorder %s97, %s98
      %p109 = scmp.eq.s32.totalorder %s25, 0
      %p110 = por %p108, %p109
      %p111 = scmp.ne.s32.totalorder %s97, %s98
      %p112 = scmp.eq.s32.totalorder %s26, 3
      %p113 = por %p111, %p112
      %p115 = scmp.ne.s32.totalorder %s98, %s114
      %p116 = scmp.eq.s32.totalorder %s26, 0
      %p117 = por %p115, %p116
      %s118 = ssub.s32 %s28, %s35
      %p119 = scmp.eq.s32.totalorder %s118, 0
      %s121 = sadd.s32 %s120, 1
      %s122 = scalar_select %p119, %s120, %s121
      %p125 = pneg %p119
      %p126 = scmp.eq.s32.totalorder %s20, 3
      %p127 = por %p125, %p126
      %p128 = scmp.ne.s32.totalorder %s120, %s123
      %p129 = scmp.eq.s32.totalorder %s20, 0
      %p130 = por %p128, %p129
      %p131 = scmp.ne.s32.totalorder %s120, %s123
      %p132 = scmp.eq.s32.totalorder %s25, 3
      %p133 = por %p131, %p132
      %p134 = scmp.ne.s32.totalorder %s123, %s124
      %p135 = scmp.eq.s32.totalorder %s25, 0
      %p136 = por %p134, %p135
      %p137 = scmp.ne.s32.totalorder %s123, %s124
      %p138 = scmp.eq.s32.totalorder %s26, 3
      %p139 = por %p137, %p138
      %p141 = scmp.ne.s32.totalorder %s124, %s140
      %p142 = scmp.eq.s32.totalorder %s26, 0
      %p143 = por %p141, %p142
      %s145 = sadd.s32 %s144, 1
      %p148 = scmp.eq.s32.totalorder %s20, 3
      %p149 = scmp.ne.s32.totalorder %s144, %s146
      %p150 = scmp.eq.s32.totalorder %s20, 0
      %p151 = por %p149, %p150
      %p152 = scmp.ne.s32.totalorder %s144, %s146
      %p153 = scmp.eq.s32.totalorder %s25, 3
      %p154 = por %p152, %p153
      %p155 = scmp.ne.s32.totalorder %s146, %s147
      %p156 = scmp.eq.s32.totalorder %s25, 0
      %p157 = por %p155, %p156
      %p158 = scmp.ne.s32.totalorder %s146, %s147
      %p159 = scmp.eq.s32.totalorder %s26, 3
      %p160 = por %p158, %p159
      %p162 = scmp.ne.s32.totalorder %s147, %s161
      %p163 = scmp.eq.s32.totalorder %s26, 0
      %p164 = por %p162, %p163
      %s165 = ssub.s32 %s27, %s39
      %p166 = scmp.eq.s32.totalorder %s165, 0
      %s168 = sadd.s32 %s167, 1
      %s169 = scalar_select %p166, %s167, %s168
      %p172 = pneg %p166
      %p173 = scmp.eq.s32.totalorder %s20, 3
      %p174 = por %p172, %p173
      %p175 = scmp.ne.s32.totalorder %s167, %s170
      %p176 = scmp.eq.s32.totalorder %s20, 0
      %p177 = por %p175, %p176
      %p178 = scmp.ne.s32.totalorder %s167, %s170
      %p179 = scmp.eq.s32.totalorder %s25, 3
      %p180 = por %p178, %p179
      %p181 = scmp.ne.s32.totalorder %s170, %s171
      %p182 = scmp.eq.s32.totalorder %s25, 0
      %p183 = por %p181, %p182
      %p184 = scmp.ne.s32.totalorder %s170, %s171
      %p185 = scmp.eq.s32.totalorder %s26, 3
      %p186 = por %p184, %p185
      %p188 = scmp.ne.s32.totalorder %s171, %s187
      %p189 = scmp.eq.s32.totalorder %s26, 0
      %p190 = por %p188, %p189
      %p191 = scmp.le.s32.totalorder 1, %s20
      %p192 = scmp.lt.s32.totalorder %s20, 5
      %p193 = pnand %p191, %p192
      %p194 = pneg %p193
      // Predicated region
      $region9: #{tpu_custom_call.1} parent=5 // pred_check
        _
      $region10: #{tpu_custom_call.1} parent=5 // pred_check_branch
        %196 = sbr.rel (%p193) target = $region12
      $region11: #{tpu_custom_call.1} parent=5 // pred_region
        %s197 = ssub.s32 %s20, 1
        // Predicated region
        $region13: #{tpu_custom_call.1} parent=11 // pred_check
          %p198 = pneg %p157
        $region14: #{tpu_custom_call.1} parent=11 // pred_check_branch
          %200 = sbr.rel (%p198) target = $region16
        $region15: #{tpu_custom_call.1} parent=11 // pred_region
          _
        $region16: #{tpu_custom_call.1} parent=11 // pred_fallthru
          _
      $region12: #{tpu_custom_call.1} parent=5 // pred_fallthru
        _
      %p201 = scmp.lt.s32.totalorder %s20, 4
      // Predicated region
      $region17: #{tpu_custom_call.1} parent=5 // pred_check
        %p202 = pneg %p201
      $region18: #{tpu_custom_call.1} parent=5 // pred_check_branch
        %204 = sbr.rel (%p202) target = $region20
      $region19: #{tpu_custom_call.1} parent=5 // pred_region
        // Predicated region
        $region21: #{tpu_custom_call.1} parent=19 // pred_check
          %p205 = pneg %p52
        $region22: #{tpu_custom_call.1} parent=19 // pred_check_branch
          %207 = sbr.rel (%p205) target = $region24
        $region23: #{tpu_custom_call.1} parent=19 // pred_region
          %s208 = sand.u32 %s42, 1
          %s209 = scalar_lea.sflag [#allocation4], %s208
          %s210 = sand.u32 %s42, 1
          %s211 = smul.addr %s210, 128
          %s212 = scalar_lea.vmem [#allocation3], %s211
          %s213 = smul.u32 16, %s27
          %s214 = ssub.s32 25, %s213
          %p215 = scmp.lt.s32.totalorder %s214, 16
          %s216 = scalar_select %p215, %s214, 16
          %s217 = smul.u32 128, %s216
          %s219 = ssub.s32 2048, %s217
          %220 = vsyncadd %s209, %s219
          %p221 = scmp.ne.s32.totalorder 0, %s217
          %s222 = smul.addr %s213, 128
          %s223 = scalar_lea.hbm %s0, %s222
          %s224 = smul.u32 8, %s216
          %s225 = sshll.u32 %s212, 4
          %s226 = int_to_ptr.vmem [resolvable:$true] %s225
          %s227 = sshll.u32 %s224, 4
          %231 = dma.hbm_to_vmem [thread:$0]  (%p221), %s223, %s227, %s226, %s209, 128, 128, 8
        $region24: #{tpu_custom_call.1} parent=19 // pred_fallthru
          _
        // Predicated region
        $region25: #{tpu_custom_call.1} parent=19 // pred_check
          %p232 = pneg %p78
        $region26: #{tpu_custom_call.1} parent=19 // pred_check_branch
          %234 = sbr.rel (%p232) target = $region28
        $region27: #{tpu_custom_call.1} parent=19 // pred_region
          %s235 = sand.u32 %s20, 1
          %s236 = scalar_lea.sflag [#allocation7], %s235
          %s237 = sand.u32 %s68, 1
          %s238 = smul.addr %s237, 128
          %s239 = scalar_lea.vmem [#allocation6], %s238
          %s241 = ssub.s32 2048, 2048
          %242 = vsyncadd %s236, %s241
          %s243 = smul.addr %s28, 128
          %s244 = scalar_lea.hbm %s1, %s243
          %s245 = sshll.u32 %s239, 4
          %s246 = int_to_ptr.vmem [resolvable:$true] %s245
          %251 = dma.hbm_to_vmem [thread:$0]  %s244, 2048, %s246, %s236, 256, 128, 8
        $region28: #{tpu_custom_call.1} parent=19 // pred_fallthru
          _
        // Predicated region
        $region29: #{tpu_custom_call.1} parent=19 // pred_check
          %p252 = pneg %p104
        $region30: #{tpu_custom_call.1} parent=19 // pred_check_branch
          %254 = sbr.rel (%p252) target = $region32
        $region31: #{tpu_custom_call.1} parent=19 // pred_region
          %p255 = scmp.lt.s32.totalorder %s28, 1
          %s256 = scalar_select %p255, %s28, 1
          %s257 = scalar_lea.vmem %s2, %s256
        $region32: #{tpu_custom_call.1} parent=19 // pred_fallthru
          _
        // Predicated region
        $region33: #{tpu_custom_call.1} parent=19 // pred_check
          %p258 = pneg %p130
        $region34: #{tpu_custom_call.1} parent=19 // pred_check_branch
          %260 = sbr.rel (%p258) target = $region36
        $region35: #{tpu_custom_call.1} parent=19 // pred_region
          %s261 = sand.u32 %s20, 1
          %s262 = scalar_lea.sflag [#allocation7], %s261
          %s263 = sand.u32 %s120, 1
          %s264 = smul.addr %s263, 128
          %s265 = scalar_lea.vmem [#allocation8], %s264
          %s266 = smul.u32 16, %s28
          %s268 = ssub.s32 2048, 2048
          %269 = vsyncadd %s262, %s268
          %s270 = smul.addr %s266, 128
          %s271 = scalar_lea.hbm %s3, %s270
          %s272 = sshll.u32 %s265, 4
          %s273 = int_to_ptr.vmem [resolvable:$true] %s272
          %278 = dma.hbm_to_vmem [thread:$0]  %s271, 2048, %s273, %s262, 128, 128, 8
        $region36: #{tpu_custom_call.1} parent=19 // pred_fallthru
          _
      $region20: #{tpu_custom_call.1} parent=5 // pred_fallthru
        _
      %p279 = scmp.le.s32.totalorder 1, %s20
      %p280 = scmp.lt.s32.totalorder %s20, 5
      %p281 = pnand %p279, %p280
      %p282 = pneg %p281
      // Predicated region
      $region37: #{tpu_custom_call.1} parent=5 // pred_check
        _
      $region38: #{tpu_custom_call.1} parent=5 // pred_check_branch
        %284 = sbr.rel (%p281) target = $region40
      $region39: #{tpu_custom_call.1} parent=5 // pred_region
        %s285 = ssub.s32 %s20, 1
        %s286 = sand.u32 %s45, 1
        %s287 = scalar_lea.sflag [#allocation4], %s286
        %s288 = sand.u32 %s45, 1
        %s289 = smul.addr %s288, 128
        %s290 = scalar_lea.vmem [#allocation3], %s289
        // Predicated region
        $region41: #{tpu_custom_call.1} parent=39 // pred_check
          %p291 = pneg %p58
        $region42: #{tpu_custom_call.1} parent=39 // pred_check_branch
          %293 = sbr.rel (%p291) target = $region44
        $region43: #{tpu_custom_call.1} parent=39 // pred_region
          %294 = dma.done %s287, 2048
        $region44: #{tpu_custom_call.1} parent=39 // pred_fallthru
          _
        %s295 = sand.u32 %s25, 1
        %s296 = scalar_lea.sflag [#allocation7], %s295
        %s297 = sand.u32 %s71, 1
        %s298 = smul.addr %s297, 128
        %s299 = scalar_lea.vmem [#allocation6], %s298
        // Predicated region
        $region45: #{tpu_custom_call.1} parent=39 // pred_check
          %p300 = pneg %p84
        $region46: #{tpu_custom_call.1} parent=39 // pred_check_branch
          %302 = sbr.rel (%p300) target = $region48
        $region47: #{tpu_custom_call.1} parent=39 // pred_region
          %303 = dma.done %s296, 2048
        $region48: #{tpu_custom_call.1} parent=39 // pred_fallthru
          _
        %s304 = sand.u32 %s25, 1
        %s305 = scalar_lea.sflag [#allocation7], %s304
        %s306 = sand.u32 %s123, 1
        %s307 = smul.addr %s306, 128
        %s308 = scalar_lea.vmem [#allocation8], %s307
        // Predicated region
        $region49: #{tpu_custom_call.1} parent=39 // pred_check
          %p309 = pneg %p136
        $region50: #{tpu_custom_call.1} parent=39 // pred_check_branch
          %311 = sbr.rel (%p309) target = $region52
        $region51: #{tpu_custom_call.1} parent=39 // pred_region
          %312 = dma.done %s305, 2048
        $region52: #{tpu_custom_call.1} parent=39 // pred_fallthru
          _
        %s313 = sand.u32 %s45, 1
        %s314 = scalar_lea.sflag [#allocation4], %s313
        %s315 = sand.u32 %s45, 1
        %s316 = smul.addr %s315, 128
        %s317 = scalar_lea.vmem [#allocation3], %s316
        %p318 = pneg %p58
        %p319 = pneg %p55
        %s320 = sand.u32 %s25, 1
        %s321 = scalar_lea.sflag [#allocation7], %s320
        %s322 = sand.u32 %s71, 1
        %s323 = smul.addr %s322, 128
        %s324 = scalar_lea.vmem [#allocation6], %s323
        %p325 = pneg %p84
        %p326 = pneg %p81
        %p327 = scmp.lt.s32.totalorder %s30, 1
        %s328 = scalar_select %p327, %s30, 1
        %s329 = scalar_lea.vmem %s2, %s328
        %p330 = pneg %p110
        %p331 = pneg %p107
        %s332 = sand.u32 %s25, 1
        %s333 = scalar_lea.sflag [#allocation7], %s332
        %s334 = sand.u32 %s123, 1
        %s335 = smul.addr %s334, 128
        %s336 = scalar_lea.vmem [#allocation8], %s335
        %p337 = pneg %p136
        %p338 = pneg %p133
        %p339 = pneg %p157
        %p340 = pneg %p154
        %p341 = pneg %p183
        %p342 = pneg %p180
        %s343 = sand.u32 %s170, 1
        %s344 = scalar_lea.sflag [#allocation5], %s343
        %s345 = sand.u32 %s170, 1
        %s346 = smul.addr %s345, 128
        %s347 = scalar_lea.vmem [#allocation9], %s346
        %s348 = smul.u32 16, %s29
        %s349 = ssub.s32 25, %s348
        %p350 = scmp.lt.s32.totalorder %s349, 16
        %s351 = scalar_select %p350, %s349, 16
        %s352 = smul.u32 128, %s351
        %p353 = scmp.lt.s32.totalorder %s30, 1
        %s354 = scalar_select %p353, %s30, 1
        %s355 = scalar_lea.vmem %s2, %s354
        %s356 = smul.u32 16, %s30
        %s357 = smul.u32 16, %s29
        %s358 = ssub.s32 25, %s357
        %p359 = scmp.lt.s32.totalorder %s358, 16
        %s360 = scalar_select %p359, %s358, 16
        %s361 = smul.u32 128, %s360
        %p362 = scmp.eq.s32.totalorder %s30, 0
        // Predicated region
        $region53: #{tpu_custom_call.1} parent=39 // pred_check
          %p363 = pneg %p362
        $region54: #{tpu_custom_call.1} parent=39 // pred_check_branch
          %365 = sbr.rel (%p363) target = $region56
        $region55: #{tpu_custom_call.1} parent=39 // pred_region
          %366 = vst [vmem:[#allocation2] sm:$0xff] 0.0
          %367 = vst [vmem:[#allocation2 + $0x8] sm:$0xff] 0.0
          %368 = vst [vmem:[#allocation2 + $0x10] sm:$0xff] 0.0
          %369 = vst [vmem:[#allocation2 + $0x18] sm:$0xff] 0.0
          %370 = vst [vmem:[#allocation2 + $0x20] sm:$0xff] 0.0
          %371 = vst [vmem:[#allocation2 + $0x28] sm:$0xff] 0.0
          %372 = vst [vmem:[#allocation2 + $0x30] sm:$0xff] 0.0
          %373 = vst [vmem:[#allocation2 + $0x38] sm:$0xff] 0.0
          %374 = vst [vmem:[#allocation2 + $0x40] sm:$0xff] 0.0
          %375 = vst [vmem:[#allocation2 + $0x48] sm:$0xff] 0.0
          %376 = vst [vmem:[#allocation2 + $0x50] sm:$0xff] 0.0
          %377 = vst [vmem:[#allocation2 + $0x58] sm:$0xff] 0.0
          %378 = vst [vmem:[#allocation2 + $0x60] sm:$0xff] 0.0
          %379 = vst [vmem:[#allocation2 + $0x68] sm:$0xff] 0.0
          %380 = vst [vmem:[#allocation2 + $0x70] sm:$0xff] 0.0
          %381 = vst [vmem:[#allocation2 + $0x78] sm:$0xff] 0.0
        $region56: #{tpu_custom_call.1} parent=39 // pred_fallthru
          _
        %v382 = vld [vmem:[%s290] sm:$0xff]
        %v383 = vld [vmem:[%s290 + $0x8] sm:$0xff]
        %v384 = vld [vmem:[%s290 + $0x10] sm:$0xff]
        %v385 = vld [vmem:[%s290 + $0x18] sm:$0xff]
        %v386 = vld [vmem:[%s290 + $0x20] sm:$0xff]
        %v387 = vld [vmem:[%s290 + $0x28] sm:$0xff]
        %v388 = vld [vmem:[%s290 + $0x30] sm:$0xff]
        %v389 = vld [vmem:[%s290 + $0x38] sm:$0xff]
        %v390 = vld [vmem:[%s290 + $0x40] sm:$0xff]
        %v391 = vld [vmem:[%s290 + $0x48] sm:$0xff]
        %v392 = vld [vmem:[%s290 + $0x50] sm:$0xff]
        %v393 = vld [vmem:[%s290 + $0x58] sm:$0xff]
        %v394 = vld [vmem:[%s290 + $0x60] sm:$0xff]
        %v395 = vld [vmem:[%s290 + $0x68] sm:$0xff]
        %v396 = vld [vmem:[%s290 + $0x70] sm:$0xff]
        %v397 = vld [vmem:[%s290 + $0x78] sm:$0xff]
        %v398 = vld [vmem:[%s299] sm:$0xff]
        %v399 = vld [vmem:[%s299 + $0x8] sm:$0xff]
        %v400 = vld [vmem:[%s299 + $0x10] sm:$0xff]
        %v401 = vld [vmem:[%s299 + $0x18] sm:$0xff]
        %v402 = vld [vmem:[%s299 + $0x20] sm:$0xff]
        %v403 = vld [vmem:[%s299 + $0x28] sm:$0xff]
        %v404 = vld [vmem:[%s299 + $0x30] sm:$0xff]
        %v405 = vld [vmem:[%s299 + $0x38] sm:$0xff]
        %v406 = vld [vmem:[%s299 + $0x40] sm:$0xff]
        %v407 = vld [vmem:[%s299 + $0x48] sm:$0xff]
        %v408 = vld [vmem:[%s299 + $0x50] sm:$0xff]
        %v409 = vld [vmem:[%s299 + $0x58] sm:$0xff]
        %v410 = vld [vmem:[%s299 + $0x60] sm:$0xff]
        %v411 = vld [vmem:[%s299 + $0x68] sm:$0xff]
        %v412 = vld [vmem:[%s299 + $0x70] sm:$0xff]
        %v413 = vld [vmem:[%s299 + $0x78] sm:$0xff]
        %v414 = vld [vmem:[%s355] sm:$0x1]
        %v416 = vlaneseq
        %v417 = vshrl.u32 %v416, 7
        %v418 = vsub.s32 0, %v417
        %v419 = vrot.slane %v414, %v418
        %421 = vmatprep.subr.mxu0 0.0
        %422 = vmatpush1.msra.mxu0 %v398
        %423 = vmatprep.subr.mxu0 0.0
        %424 = vmatpush1.msra.mxu0 %v399
        %425 = vmatprep.subr.mxu0 0.0
        %426 = vmatpush1.msra.mxu0 %v400
        %427 = vmatprep.subr.mxu0 0.0
        %428 = vmatpush1.msra.mxu0 %v401
        %429 = vmatprep.subr.mxu0 0.0
        %430 = vmatpush1.msra.mxu0 %v402
        %431 = vmatprep.subr.mxu0 0.0
        %432 = vmatpush1.msra.mxu0 %v403
        %433 = vmatprep.subr.mxu0 0.0
        %434 = vmatpush1.msra.mxu0 %v404
        %435 = vmatprep.subr.mxu0 0.0
        %436 = vmatpush1.msra.mxu0 %v405
        %437 = vmatprep.subr.mxu0 0.0
        %438 = vmatpush1.msra.mxu0 %v406
        %439 = vmatprep.subr.mxu0 0.0
        %440 = vmatpush1.msra.mxu0 %v407
        %441 = vmatprep.subr.mxu0 0.0
        %442 = vmatpush1.msra.mxu0 %v408
        %443 = vmatprep.subr.mxu0 0.0
        %444 = vmatpush1.msra.mxu0 %v409
        %445 = vmatprep.subr.mxu0 0.0
        %446 = vmatpush1.msra.mxu0 %v410
        %447 = vmatprep.subr.mxu0 0.0
        %448 = vmatpush1.msra.mxu0 %v411
        %449 = vmatprep.subr.mxu0 0.0
        %450 = vmatpush1.msra.mxu0 %v412
        %451 = vmatprep.subr.mxu0 0.0
        %452 = vmatpush1.msra.mxu0 %v413
        %453 = vmatprep.subr.mxu0 0.0
        %454 = vmatpush1.msra.mxu0 0.0
        %455 = vmatprep.subr.mxu0 0.0
        %456 = vmatpush1.msra.mxu0 0.0
        %457 = vmatprep.subr.mxu0 0.0
        %458 = vmatpush1.msra.mxu0 0.0
        %459 = vmatprep.subr.mxu0 0.0
        %460 = vmatpush1.msra.mxu0 0.0
        %461 = vmatprep.subr.mxu0 0.0
        %462 = vmatpush1.msra.mxu0 0.0
        %463 = vmatprep.subr.mxu0 0.0
        %464 = vmatpush1.msra.mxu0 0.0
        %465 = vmatprep.subr.mxu0 0.0
        %466 = vmatpush1.msra.mxu0 0.0
        %467 = vmatprep.subr.mxu0 0.0
        %468 = vmatpush1.msra.mxu0 0.0
        %469 = vmatprep.subr.mxu0 0.0
        %470 = vmatpush1.msra.mxu0 0.0
        %471 = vmatprep.subr.mxu0 0.0
        %472 = vmatpush1.msra.mxu0 0.0
        %473 = vmatprep.subr.mxu0 0.0
        %474 = vmatpush1.msra.mxu0 0.0
        %475 = vmatprep.subr.mxu0 0.0
        %476 = vmatpush1.msra.mxu0 0.0
        %477 = vmatprep.subr.mxu0 0.0
        %478 = vmatpush1.msra.mxu0 0.0
        %479 = vmatprep.subr.mxu0 0.0
        %480 = vmatpush1.msra.mxu0 0.0
        %481 = vmatprep.subr.mxu0 0.0
        %482 = vmatpush1.msra.mxu0 0.0
        %483 = vmatprep.subr.mxu0 0.0
        %484 = vmatpush1.msra.mxu0 0.0
        %485 = vmatprep.mubr.f32.mxu0 0.0
        %486 = vmatmul.mubr.f32.gmra.mrb[0].mxu0 %v382
        %v487 = vpop.f32.mrb[0].mxu0
        %v488 = vadd.f32 %v419, %v487
        %v489 = vpop.f32.mrb[0].mxu0
        %490 = vmatprep.mubr.f32.mxu0 0.0
        %491 = vmatmul.mubr.f32.gmra.mrb[0].mxu0 %v383
        %v492 = vpop.f32.mrb[0].mxu0
        %v493 = vadd.f32 %v419, %v492
        %v494 = vpop.f32.mrb[0].mxu0
        %495 = vmatprep.mubr.f32.mxu0 0.0
        %496 = vmatmul.mubr.f32.gmra.mrb[0].mxu0 %v384
        %v497 = vpop.f32.mrb[0].mxu0
        %v498 = vadd.f32 %v419, %v497
        %v499 = vpop.f32.mrb[0].mxu0
        %500 = vmatprep.mubr.f32.mxu0 0.0
        %501 = vmatmul.mubr.f32.gmra.mrb[0].mxu0 %v385
        %v502 = vpop.f32.mrb[0].mxu0
        %v503 = vadd.f32 %v419, %v502
        %v504 = vpop.f32.mrb[0].mxu0
        %505 = vmatprep.mubr.f32.mxu0 0.0
        %506 = vmatmul.mubr.f32.gmra.mrb[0].mxu0 %v386
        %v507 = vpop.f32.mrb[0].mxu0
        %v508 = vadd.f32 %v419, %v507
        %v509 = vpop.f32.mrb[0].mxu0
        %510 = vmatprep.mubr.f32.mxu0 0.0
        %511 = vmatmul.mubr.f32.gmra.mrb[0].mxu0 %v387
        %v512 = vpop.f32.mrb[0].mxu0
        %v513 = vadd.f32 %v419, %v512
        %v514 = vpop.f32.mrb[0].mxu0
        %515 = vmatprep.mubr.f32.mxu0 0.0
        %516 = vmatmul.mubr.f32.gmra.mrb[0].mxu0 %v388
        %v517 = vpop.f32.mrb[0].mxu0
        %v518 = vadd.f32 %v419, %v517
        %v519 = vpop.f32.mrb[0].mxu0
        %520 = vmatprep.mubr.f32.mxu0 0.0
        %521 = vmatmul.mubr.f32.gmra.mrb[0].mxu0 %v389
        %v522 = vpop.f32.mrb[0].mxu0
        %v523 = vadd.f32 %v419, %v522
        %v524 = vpop.f32.mrb[0].mxu0
        %525 = vmatprep.mubr.f32.mxu0 0.0
        %526 = vmatmul.mubr.f32.gmra.mrb[0].mxu0 %v390
        %v527 = vpop.f32.mrb[0].mxu0
        %v528 = vadd.f32 %v419, %v527
        %v529 = vpop.f32.mrb[0].mxu0
        %530 = vmatprep.mubr.f32.mxu0 0.0
        %531 = vmatmul.mubr.f32.gmra.mrb[0].mxu0 %v391
        %v532 = vpop.f32.mrb[0].mxu0
        %v533 = vadd.f32 %v419, %v532
        %v534 = vpop.f32.mrb[0].mxu0
        %535 = vmatprep.mubr.f32.mxu0 0.0
        %536 = vmatmul.mubr.f32.gmra.mrb[0].mxu0 %v392
        %v537 = vpop.f32.mrb[0].mxu0
        %v538 = vadd.f32 %v419, %v537
        %v539 = vpop.f32.mrb[0].mxu0
        %540 = vmatprep.mubr.f32.mxu0 0.0
        %541 = vmatmul.mubr.f32.gmra.mrb[0].mxu0 %v393
        %v542 = vpop.f32.mrb[0].mxu0
        %v543 = vadd.f32 %v419, %v542
        %v544 = vpop.f32.mrb[0].mxu0
        %545 = vmatprep.mubr.f32.mxu0 0.0
        %546 = vmatmul.mubr.f32.gmra.mrb[0].mxu0 %v394
        %v547 = vpop.f32.mrb[0].mxu0
        %v548 = vadd.f32 %v419, %v547
        %v549 = vpop.f32.mrb[0].mxu0
        %550 = vmatprep.mubr.f32.mxu0 0.0
        %551 = vmatmul.mubr.f32.gmra.mrb[0].mxu0 %v395
        %v552 = vpop.f32.mrb[0].mxu0
        %v553 = vadd.f32 %v419, %v552
        %v554 = vpop.f32.mrb[0].mxu0
        %555 = vmatprep.mubr.f32.mxu0 0.0
        %556 = vmatmul.mubr.f32.gmra.mrb[0].mxu0 %v396
        %v557 = vpop.f32.mrb[0].mxu0
        %v558 = vadd.f32 %v419, %v557
        %v559 = vpop.f32.mrb[0].mxu0
        %560 = vmatprep.mubr.f32.mxu0 0.0
        %561 = vmatmul.mubr.f32.gmra.mrb[0].mxu0 %v397
        %v562 = vpop.f32.mrb[0].mxu0
        %v563 = vadd.f32 %v419, %v562
        %v564 = vpop.f32.mrb[0].mxu0
        %565 = vdwg.mxu0
        %v566 = vmax.f32 %v488, 0.0
        %v567 = vmax.f32 %v493, 0.0
        %v568 = vmax.f32 %v498, 0.0
        %v569 = vmax.f32 %v503, 0.0
        %v570 = vmax.f32 %v508, 0.0
        %v571 = vmax.f32 %v513, 0.0
        %v572 = vmax.f32 %v518, 0.0
        %v573 = vmax.f32 %v523, 0.0
        %v574 = vmax.f32 %v528, 0.0
        %v575 = vmax.f32 %v533, 0.0
        %v576 = vmax.f32 %v538, 0.0
        %v577 = vmax.f32 %v543, 0.0
        %v578 = vmax.f32 %v548, 0.0
        %v579 = vmax.f32 %v553, 0.0
        %v580 = vmax.f32 %v558, 0.0
        %v581 = vmax.f32 %v563, 0.0
        %v582 = vld [vmem:[#allocation2] sm:$0xff]
        %v583 = vld [vmem:[#allocation2 + $0x8] sm:$0xff]
        %v584 = vld [vmem:[#allocation2 + $0x10] sm:$0xff]
        %v585 = vld [vmem:[#allocation2 + $0x18] sm:$0xff]
        %v586 = vld [vmem:[#allocation2 + $0x20] sm:$0xff]
        %v587 = vld [vmem:[#allocation2 + $0x28] sm:$0xff]
        %v588 = vld [vmem:[#allocation2 + $0x30] sm:$0xff]
        %v589 = vld [vmem:[#allocation2 + $0x38] sm:$0xff]
        %v590 = vld [vmem:[#allocation2 + $0x40] sm:$0xff]
        %v591 = vld [vmem:[#allocation2 + $0x48] sm:$0xff]
        %v592 = vld [vmem:[#allocation2 + $0x50] sm:$0xff]
        %v593 = vld [vmem:[#allocation2 + $0x58] sm:$0xff]
        %v594 = vld [vmem:[#allocation2 + $0x60] sm:$0xff]
        %v595 = vld [vmem:[#allocation2 + $0x68] sm:$0xff]
        %v596 = vld [vmem:[#allocation2 + $0x70] sm:$0xff]
        %v597 = vld [vmem:[#allocation2 + $0x78] sm:$0xff]
        %v598 = vld [vmem:[%s308] sm:$0xff]
        %v599 = vld [vmem:[%s308 + $0x8] sm:$0xff]
        %v600 = vld [vmem:[%s308 + $0x10] sm:$0xff]
        %v601 = vld [vmem:[%s308 + $0x18] sm:$0xff]
        %v602 = vld [vmem:[%s308 + $0x20] sm:$0xff]
        %v603 = vld [vmem:[%s308 + $0x28] sm:$0xff]
        %v604 = vld [vmem:[%s308 + $0x30] sm:$0xff]
        %v605 = vld [vmem:[%s308 + $0x38] sm:$0xff]
        %v606 = vld [vmem:[%s308 + $0x40] sm:$0xff]
        %v607 = vld [vmem:[%s308 + $0x48] sm:$0xff]
        %v608 = vld [vmem:[%s308 + $0x50] sm:$0xff]
        %v609 = vld [vmem:[%s308 + $0x58] sm:$0xff]
        %v610 = vld [vmem:[%s308 + $0x60] sm:$0xff]
        %v611 = vld [vmem:[%s308 + $0x68] sm:$0xff]
        %v612 = vld [vmem:[%s308 + $0x70] sm:$0xff]
        %v613 = vld [vmem:[%s308 + $0x78] sm:$0xff]
        %614 = vmatprep.subr.mxu0 0.0
        %615 = vmatpush1.msra.mxu0 %v598
        %616 = vmatprep.subr.mxu0 0.0
        %617 = vmatpush1.msra.mxu0 %v599
        %618 = vmatprep.subr.mxu0 0.0
        %619 = vmatpush1.msra.mxu0 %v600
        %620 = vmatprep.subr.mxu0 0.0
        %621 = vmatpush1.msra.mxu0 %v601
        %622 = vmatprep.subr.mxu0 0.0
        %623 = vmatpush1.msra.mxu0 %v602
        %624 = vmatprep.subr.mxu0 0.0
        %625 = vmatpush1.msra.mxu0 %v603
        %626 = vmatprep.subr.mxu0 0.0
        %627 = vmatpush1.msra.mxu0 %v604
        %628 = vmatprep.subr.mxu0 0.0
        %629 = vmatpush1.msra.mxu0 %v605
        %630 = vmatprep.subr.mxu0 0.0
        %631 = vmatpush1.msra.mxu0 %v606
        %632 = vmatprep.subr.mxu0 0.0
        %633 = vmatpush1.msra.mxu0 %v607
        %634 = vmatprep.subr.mxu0 0.0
        %635 = vmatpush1.msra.mxu0 %v608
        %636 = vmatprep.subr.mxu0 0.0
        %637 = vmatpush1.msra.mxu0 %v609
        %638 = vmatprep.subr.mxu0 0.0
        %639 = vmatpush1.msra.mxu0 %v610
        %640 = vmatprep.subr.mxu0 0.0
        %641 = vmatpush1.msra.mxu0 %v611
        %642 = vmatprep.subr.mxu0 0.0
        %643 = vmatpush1.msra.mxu0 %v612
        %644 = vmatprep.subr.mxu0 0.0
        %645 = vmatpush1.msra.mxu0 %v613
        %646 = vmatprep.subr.mxu0 0.0
        %647 = vmatpush1.msra.mxu0 0.0
        %648 = vmatprep.subr.mxu0 0.0
        %649 = vmatpush1.msra.mxu0 0.0
        %650 = vmatprep.subr.mxu0 0.0
        %651 = vmatpush1.msra.mxu0 0.0
        %652 = vmatprep.subr.mxu0 0.0
        %653 = vmatpush1.msra.mxu0 0.0
        %654 = vmatprep.subr.mxu0 0.0
        %655 = vmatpush1.msra.mxu0 0.0
        %656 = vmatprep.subr.mxu0 0.0
        %657 = vmatpush1.msra.mxu0 0.0
        %658 = vmatprep.subr.mxu0 0.0
        %659 = vmatpush1.msra.mxu0 0.0
        %660 = vmatprep.subr.mxu0 0.0
        %661 = vmatpush1.msra.mxu0 0.0
        %662 = vmatprep.subr.mxu0 0.0
        %663 = vmatpush1.msra.mxu0 0.0
        %664 = vmatprep.subr.mxu0 0.0
        %665 = vmatpush1.msra.mxu0 0.0
        %666 = vmatprep.subr.mxu0 0.0
        %667 = vmatpush1.msra.mxu0 0.0
        %668 = vmatprep.subr.mxu0 0.0
        %669 = vmatpush1.msra.mxu0 0.0
        %670 = vmatprep.subr.mxu0 0.0
        %671 = vmatpush1.msra.mxu0 0.0
        %672 = vmatprep.subr.mxu0 0.0
        %673 = vmatpush1.msra.mxu0 0.0
        %674 = vmatprep.subr.mxu0 0.0
        %675 = vmatpush1.msra.mxu0 0.0
        %676 = vmatprep.subr.mxu0 0.0
        %677 = vmatpush1.msra.mxu0 0.0
        %678 = vmatprep.mubr.f32.mxu0 0.0
        %679 = vmatmul.mubr.f32.gmra.mrb[0].mxu0 %v566
        %v680 = vpop.f32.mrb[0].mxu0
        %v681 = vadd.f32 0.0, %v680
        %v682 = vpop.f32.mrb[0].mxu0
        %683 = vmatprep.mubr.f32.mxu0 0.0
        %684 = vmatmul.mubr.f32.gmra.mrb[0].mxu0 %v567
        %v685 = vpop.f32.mrb[0].mxu0
        %v686 = vadd.f32 0.0, %v685
        %v687 = vpop.f32.mrb[0].mxu0
        %688 = vmatprep.mubr.f32.mxu0 0.0
        %689 = vmatmul.mubr.f32.gmra.mrb[0].mxu0 %v568
        %v690 = vpop.f32.mrb[0].mxu0
        %v691 = vadd.f32 0.0, %v690
        %v692 = vpop.f32.mrb[0].mxu0
        %693 = vmatprep.mubr.f32.mxu0 0.0
        %694 = vmatmul.mubr.f32.gmra.mrb[0].mxu0 %v569
        %v695 = vpop.f32.mrb[0].mxu0
        %v696 = vadd.f32 0.0, %v695
        %v697 = vpop.f32.mrb[0].mxu0
        %698 = vmatprep.mubr.f32.mxu0 0.0
        %699 = vmatmul.mubr.f32.gmra.mrb[0].mxu0 %v570
        %v700 = vpop.f32.mrb[0].mxu0
        %v701 = vadd.f32 0.0, %v700
        %v702 = vpop.f32.mrb[0].mxu0
        %703 = vmatprep.mubr.f32.mxu0 0.0
        %704 = vmatmul.mubr.f32.gmra.mrb[0].mxu0 %v571
        %v705 = vpop.f32.mrb[0].mxu0
        %v706 = vadd.f32 0.0, %v705
        %v707 = vpop.f32.mrb[0].mxu0
        %708 = vmatprep.mubr.f32.mxu0 0.0
        %709 = vmatmul.mubr.f32.gmra.mrb[0].mxu0 %v572
        %v710 = vpop.f32.mrb[0].mxu0
        %v711 = vadd.f32 0.0, %v710
        %v712 = vpop.f32.mrb[0].mxu0
        %713 = vmatprep.mubr.f32.mxu0 0.0
        %714 = vmatmul.mubr.f32.gmra.mrb[0].mxu0 %v573
        %v715 = vpop.f32.mrb[0].mxu0
        %v716 = vadd.f32 0.0, %v715
        %v717 = vpop.f32.mrb[0].mxu0
        %718 = vmatprep.mubr.f32.mxu0 0.0
        %719 = vmatmul.mubr.f32.gmra.mrb[0].mxu0 %v574
        %v720 = vpop.f32.mrb[0].mxu0
        %v721 = vadd.f32 0.0, %v720
        %v722 = vpop.f32.mrb[0].mxu0
        %723 = vmatprep.mubr.f32.mxu0 0.0
        %724 = vmatmul.mubr.f32.gmra.mrb[0].mxu0 %v575
        %v725 = vpop.f32.mrb[0].mxu0
        %v726 = vadd.f32 0.0, %v725
        %v727 = vpop.f32.mrb[0].mxu0
        %728 = vmatprep.mubr.f32.mxu0 0.0
        %729 = vmatmul.mubr.f32.gmra.mrb[0].mxu0 %v576
        %v730 = vpop.f32.mrb[0].mxu0
        %v731 = vadd.f32 0.0, %v730
        %v732 = vpop.f32.mrb[0].mxu0
        %733 = vmatprep.mubr.f32.mxu0 0.0
        %734 = vmatmul.mubr.f32.gmra.mrb[0].mxu0 %v577
        %v735 = vpop.f32.mrb[0].mxu0
        %v736 = vadd.f32 0.0, %v735
        %v737 = vpop.f32.mrb[0].mxu0
        %738 = vmatprep.mubr.f32.mxu0 0.0
        %739 = vmatmul.mubr.f32.gmra.mrb[0].mxu0 %v578
        %v740 = vpop.f32.mrb[0].mxu0
        %v741 = vadd.f32 0.0, %v740
        %v742 = vpop.f32.mrb[0].mxu0
        %743 = vmatprep.mubr.f32.mxu0 0.0
        %744 = vmatmul.mubr.f32.gmra.mrb[0].mxu0 %v579
        %v745 = vpop.f32.mrb[0].mxu0
        %v746 = vadd.f32 0.0, %v745
        %v747 = vpop.f32.mrb[0].mxu0
        %748 = vmatprep.mubr.f32.mxu0 0.0
        %749 = vmatmul.mubr.f32.gmra.mrb[0].mxu0 %v580
        %v750 = vpop.f32.mrb[0].mxu0
        %v751 = vadd.f32 0.0, %v750
        %v752 = vpop.f32.mrb[0].mxu0
        %753 = vmatprep.mubr.f32.mxu0 0.0
        %754 = vmatmul.mubr.f32.gmra.mrb[0].mxu0 %v581
        %v755 = vpop.f32.mrb[0].mxu0
        %v756 = vadd.f32 0.0, %v755
        %v757 = vpop.f32.mrb[0].mxu0
        %758 = vdwg.mxu0
        %v759 = vadd.f32 %v582, %v681
        %v760 = vadd.f32 %v583, %v686
        %v761 = vadd.f32 %v584, %v691
        %v762 = vadd.f32 %v585, %v696
        %v763 = vadd.f32 %v586, %v701
        %v764 = vadd.f32 %v587, %v706
        %v765 = vadd.f32 %v588, %v711
        %v766 = vadd.f32 %v589, %v716
        %v767 = vadd.f32 %v590, %v721
        %v768 = vadd.f32 %v591, %v726
        %v769 = vadd.f32 %v592, %v731
        %v770 = vadd.f32 %v593, %v736
        %v771 = vadd.f32 %v594, %v741
        %v772 = vadd.f32 %v595, %v746
        %v773 = vadd.f32 %v596, %v751
        %v774 = vadd.f32 %v597, %v756
        %775 = vst [vmem:[#allocation2] sm:$0xff] %v759
        %776 = vst [vmem:[#allocation2 + $0x8] sm:$0xff] %v760
        %777 = vst [vmem:[#allocation2 + $0x10] sm:$0xff] %v761
        %778 = vst [vmem:[#allocation2 + $0x18] sm:$0xff] %v762
        %779 = vst [vmem:[#allocation2 + $0x20] sm:$0xff] %v763
        %780 = vst [vmem:[#allocation2 + $0x28] sm:$0xff] %v764
        %781 = vst [vmem:[#allocation2 + $0x30] sm:$0xff] %v765
        %782 = vst [vmem:[#allocation2 + $0x38] sm:$0xff] %v766
        %783 = vst [vmem:[#allocation2 + $0x40] sm:$0xff] %v767
        %784 = vst [vmem:[#allocation2 + $0x48] sm:$0xff] %v768
        %785 = vst [vmem:[#allocation2 + $0x50] sm:$0xff] %v769
        %786 = vst [vmem:[#allocation2 + $0x58] sm:$0xff] %v770
        %787 = vst [vmem:[#allocation2 + $0x60] sm:$0xff] %v771
        %788 = vst [vmem:[#allocation2 + $0x68] sm:$0xff] %v772
        %789 = vst [vmem:[#allocation2 + $0x70] sm:$0xff] %v773
        %790 = vst [vmem:[#allocation2 + $0x78] sm:$0xff] %v774
        %p791 = scmp.eq.s32.totalorder %s30, 1
        // Predicated region
        $region57: #{tpu_custom_call.1} parent=39 // pred_check
          %p792 = pneg %p791
        $region58: #{tpu_custom_call.1} parent=39 // pred_check_branch
          %794 = sbr.rel (%p792) target = $region60
        $region59: #{tpu_custom_call.1} parent=39 // pred_region
          %v795 = vld [vmem:[#allocation2] sm:$0xff]
          %v796 = vld [vmem:[#allocation2 + $0x8] sm:$0xff]
          %v797 = vld [vmem:[#allocation2 + $0x10] sm:$0xff]
          %v798 = vld [vmem:[#allocation2 + $0x18] sm:$0xff]
          %v799 = vld [vmem:[#allocation2 + $0x20] sm:$0xff]
          %v800 = vld [vmem:[#allocation2 + $0x28] sm:$0xff]
          %v801 = vld [vmem:[#allocation2 + $0x30] sm:$0xff]
          %v802 = vld [vmem:[#allocation2 + $0x38] sm:$0xff]
          %v803 = vld [vmem:[#allocation2 + $0x40] sm:$0xff]
          %v804 = vld [vmem:[#allocation2 + $0x48] sm:$0xff]
          %v805 = vld [vmem:[#allocation2 + $0x50] sm:$0xff]
          %v806 = vld [vmem:[#allocation2 + $0x58] sm:$0xff]
          %v807 = vld [vmem:[#allocation2 + $0x60] sm:$0xff]
          %v808 = vld [vmem:[#allocation2 + $0x68] sm:$0xff]
          %v809 = vld [vmem:[#allocation2 + $0x70] sm:$0xff]
          %v810 = vld [vmem:[#allocation2 + $0x78] sm:$0xff]
          %v811 = vld [vmem:[%s4] sm:$0x1]
          %v813 = vlaneseq
          %v814 = vshrl.u32 %v813, 7
          %v815 = vsub.s32 0, %v814
          %v816 = vrot.slane %v811, %v815
          %v818 = vadd.f32 %v795, %v816
          %v819 = vadd.f32 %v796, %v816
          %v820 = vadd.f32 %v797, %v816
          %v821 = vadd.f32 %v798, %v816
          %v822 = vadd.f32 %v799, %v816
          %v823 = vadd.f32 %v800, %v816
          %v824 = vadd.f32 %v801, %v816
          %v825 = vadd.f32 %v802, %v816
          %v826 = vadd.f32 %v803, %v816
          %v827 = vadd.f32 %v804, %v816
          %v828 = vadd.f32 %v805, %v816
          %v829 = vadd.f32 %v806, %v816
          %v830 = vadd.f32 %v807, %v816
          %v831 = vadd.f32 %v808, %v816
          %v832 = vadd.f32 %v809, %v816
          %v833 = vadd.f32 %v810, %v816
          %834 = vst [vmem:[%s347] sm:$0xff] %v818
          %835 = vst [vmem:[%s347 + $0x8] sm:$0xff] %v819
          %836 = vst [vmem:[%s347 + $0x10] sm:$0xff] %v820
          %837 = vst [vmem:[%s347 + $0x18] sm:$0xff] %v821
          %838 = vst [vmem:[%s347 + $0x20] sm:$0xff] %v822
          %839 = vst [vmem:[%s347 + $0x28] sm:$0xff] %v823
          %840 = vst [vmem:[%s347 + $0x30] sm:$0xff] %v824
          %841 = vst [vmem:[%s347 + $0x38] sm:$0xff] %v825
          %842 = vst [vmem:[%s347 + $0x40] sm:$0xff] %v826
          %843 = vst [vmem:[%s347 + $0x48] sm:$0xff] %v827
          %844 = vst [vmem:[%s347 + $0x50] sm:$0xff] %v828
          %845 = vst [vmem:[%s347 + $0x58] sm:$0xff] %v829
          %846 = vst [vmem:[%s347 + $0x60] sm:$0xff] %v830
          %847 = vst [vmem:[%s347 + $0x68] sm:$0xff] %v831
          %848 = vst [vmem:[%s347 + $0x70] sm:$0xff] %v832
          %849 = vst [vmem:[%s347 + $0x78] sm:$0xff] %v833
        $region60: #{tpu_custom_call.1} parent=39 // pred_fallthru
          _
        %s850 = sand.u32 %s170, 1
        %s851 = scalar_lea.sflag [#allocation5], %s850
        %s852 = sand.u32 %s170, 1
        %s853 = smul.addr %s852, 128
        %s854 = scalar_lea.vmem [#allocation9], %s853
        // Predicated region
        $region61: #{tpu_custom_call.1} parent=39 // pred_check
          %p855 = pneg %p180
        $region62: #{tpu_custom_call.1} parent=39 // pred_check_branch
          %857 = sbr.rel (%p855) target = $region64
        $region63: #{tpu_custom_call.1} parent=39 // pred_region
          %s858 = smul.u32 16, %s29
          %s859 = ssub.s32 25, %s858
          %p860 = scmp.lt.s32.totalorder %s859, 16
          %s861 = scalar_select %p860, %s859, 16
          %s862 = smul.u32 128, %s861
          %s864 = ssub.s32 2048, %s862
          %865 = vsyncadd %s851, %s864
          %p866 = scmp.ne.s32.totalorder 0, %s862
          %s867 = smul.addr %s858, 128
          %s868 = scalar_lea.hbm %s5, %s867
          %s869 = smul.u32 8, %s861
          %s870 = sshll.u32 %s854, 4
          %s871 = int_to_ptr.vmem [resolvable:$true] %s870
          %s872 = sshll.u32 %s869, 4
          %876 = dma.vmem_to_hbm [thread:$0]  (%p866), %s871, %s872, %s868, %s851, 128, 128, 8
        $region64: #{tpu_custom_call.1} parent=39 // pred_fallthru
          _
      $region40: #{tpu_custom_call.1} parent=5 // pred_fallthru
        _
      %p877 = scmp.le.s32.totalorder 2, %s20
      // Predicated region
      $region65: #{tpu_custom_call.1} parent=5 // pred_check
        %p878 = pneg %p877
      $region66: #{tpu_custom_call.1} parent=5 // pred_check_branch
        %880 = sbr.rel (%p878) target = $region68
      $region67: #{tpu_custom_call.1} parent=5 // pred_region
        %s881 = ssub.s32 %s20, 2
        // Predicated region
        $region69: #{tpu_custom_call.1} parent=67 // pred_check
          %p882 = pneg %p186
        $region70: #{tpu_custom_call.1} parent=67 // pred_check_branch
          %884 = sbr.rel (%p882) target = $region72
        $region71: #{tpu_custom_call.1} parent=67 // pred_region
          %s885 = sand.u32 %s171, 1
          %s886 = scalar_lea.sflag [#allocation5], %s885
          %s887 = sand.u32 %s171, 1
          %s888 = smul.addr %s887, 128
          %s889 = scalar_lea.vmem [#allocation9], %s888
          %890 = dma.done %s886, 2048
        $region72: #{tpu_custom_call.1} parent=67 // pred_fallthru
          _
      $region68: #{tpu_custom_call.1} parent=5 // pred_fallthru
        _
    $region6: #{tpu_custom_call.1} parent=1 // loop_footer
      %s24 = sadd.s32 1, %s20
    $region7: #{tpu_custom_call.1} parent=1 // loop_footer_branch
      %19 = sbr.rel target = $region3
    $region8: #{tpu_custom_call.1} parent=1 // loop_exit
      _
    %891 = vsyncpa [#allocation4], 1
    %s892 = scalar_lea.sflag [#allocation4], 1
    %893 = vsyncpa %s892, 1
    %894 = vsyncpa [#allocation7], 1
    %s895 = scalar_lea.sflag [#allocation7], 1
    %896 = vsyncpa %s895, 1
    %897 = vsyncpa [#allocation5], 1
    %s898 = scalar_lea.sflag [#allocation5], 1
    %899 = vsyncpa %s898, 1

</llo_original>
